<compile_context>
chip_gen: v7x
topology: tpu7x:2x2x1
jax: 0.10.0
libtpu: 0.0.40
codegen_flags: <defaults>
</compile_context>

<pallas_src>
import jax
import jax.numpy as jnp
from jax import lax
from jax.experimental import pallas as pl
from jax.experimental.pallas import tpu as pltpu


def gcn_fused_kernel(w_ref, x_ref, o_ref):
    # w_ref: (N*Cin, N*Cout)  fused kron(A_hat, W^T), resident in VMEM
    # x_ref: (TBT, N*Cin)     lane-dense feature rows (one row per (b,t) slab)
    # o_ref: (TBT, N*Cout)    lane-dense output rows
    o_ref[...] = jnp.dot(
        x_ref[...], w_ref[...], preferred_element_type=jnp.float32
    ).astype(o_ref.dtype)


def _pick_row_tiling(bt):
    """Choose rows ((b,t) slabs) per grid step: sublane-aligned, big enough to
    amortize per-step overhead, and >= 2 grid steps when there is enough work
    (v7x has 2 TensorCores)."""
    bt_pad = max(8, ((bt + 7) // 8) * 8)
    tbt = min(bt_pad, 512)
    if bt_pad == tbt and bt_pad >= 16:
        tbt = ((bt_pad // 2 + 7) // 8) * 8
    bt_pad = ((bt_pad + tbt - 1) // tbt) * tbt
    return bt_pad, tbt


def gcn_forward(features, A, W):
    """features: (B,T,N,Cin) f32; A: (N,N) f32; W: (Cout,Cin) (torch Linear layout)."""
    B, T, N, Cin = features.shape
    Cout = W.shape[0]
    BT = B * T

    # ---- grid-invariant precompute, hoisted out of the kernel (runs once) ----
    A_sl = A.astype(jnp.float32) + jnp.eye(N, dtype=jnp.float32)      # self-loops
    deg = jnp.sum(A_sl, axis=-1)
    dinv = lax.rsqrt(deg + 1e-4)                                      # (deg+tol)^-0.5
    A_hat = dinv[:, None] * A_sl * dinv[None, :]                      # D^-1/2 A D^-1/2
    Wt = jnp.transpose(W).astype(jnp.float32)                         # (Cin, Cout)

    # Fuse both contractions into one matrix:
    #   kron[m*Cin+i, n*Cout+c] = A_hat[m,n] * Wt[i,c]
    #   => out[n,c] = sum_{m,i} X[m,i] * A_hat[m,n] * W[c,i]   (exact refactor)
    # Sized for the module's small node count: (N*Cin)x(N*Cout) f32
    # (128x256x4B = 128 KiB here) must stay comfortably within VMEM.
    # TODO(synk): for large N fall back to a two-stage (X@W^T then A_hat mix) path.
    W_fused = jnp.kron(A_hat, Wt)                                     # (N*Cin, N*Cout)

    K = N * Cin            # 128  : lane-dense input width
    Cl = N * Cout          # 256  : lane-dense output width

    x_rows = features.astype(jnp.float32).reshape(BT, K)
    bt_pad, tbt = _pick_row_tiling(BT)
    if bt_pad != BT:
        x_rows = jnp.pad(x_rows, ((0, bt_pad - BT), (0, 0)))
    grid = bt_pad // tbt

    out_rows = pl.pallas_call(
        gcn_fused_kernel,
        out_shape=jax.ShapeDtypeStruct((bt_pad, Cl), jnp.float32),
        grid_spec=pltpu.PrefetchScalarGridSpec(
            num_scalar_prefetch=0,
            grid=(grid,),
            in_specs=[
                pl.BlockSpec((K, Cl), lambda i: (0, 0)),      # fused weight (resident)
                pl.BlockSpec((tbt, K), lambda i: (i, 0)),     # feature rows
            ],
            out_specs=pl.BlockSpec((tbt, Cl), lambda i: (i, 0)),
        ),
        compiler_params=pltpu.CompilerParams(
            dimension_semantics=("parallel",)),
    )(W_fused, x_rows)

    return out_rows[:BT].reshape(B, T, N, Cout)


def gcn_reference(features, A, W):
    """Plain-JAX reference mirroring the PyTorch forward (use_bn=False)."""
    N = A.shape[-1]
    A = A + jnp.eye(N, dtype=A.dtype)
    d = jnp.sum(A, axis=-1)
    dinv = (d + 1e-4) ** -0.5
    A_hat = dinv[:, None] * A * dinv[None, :]
    H = jnp.einsum("btni,oi->btno", features, W,
                   precision=lax.Precision.HIGHEST)
    # out.transpose(-1,-2) @ A_hat, then final transpose(-1,-2)
    return jnp.einsum("btmc,mn->btnc", H, A_hat,
                      precision=lax.Precision.HIGHEST)


if __name__ == "__main__":
    # Small shapes: batch=2, time=8, num_nodes=8, in_dim=16, out_dim=32
    B, T, N, Cin, Cout = 2, 8, 8, 16, 32
    key = jax.random.PRNGKey(0)
    k_x, k_a, k_w = jax.random.split(key, 3)

    features = jax.random.normal(k_x, (B, T, N, Cin), dtype=jnp.float32)
    A = jax.random.uniform(k_a, (N, N), dtype=jnp.float32)   # adjacency (non-negative)

    # Deterministic Xavier-uniform init for the Linear weight (Cout, Cin), bias=False
    bound = (6.0 / (Cin + Cout)) ** 0.5
    W = jax.random.uniform(k_w, (Cout, Cin), minval=-bound, maxval=bound,
                           dtype=jnp.float32)

    # TODO(synk): use_bn=True (BatchNorm2d) branch and the >2-D batched-adjacency
    # branch of A_tilde are not implemented (module defaults exercise neither).

    out = gcn_forward(features, A, W)
    out = jax.block_until_ready(out)

    ref = gcn_reference(features, A, W)
    assert out.shape == (B, T, N, Cout)
    max_err = jnp.max(jnp.abs(out - ref))
    assert jnp.allclose(out, ref, atol=1e-3, rtol=1e-3), (
        f"mismatch vs reference (max abs err {max_err})")

    print("KERNEL_OK")
</pallas_src>

<mosaic_0001>
module attributes {stable_mosaic.version = 11 : i64} {
  func.func @gcn_fused_kernel(%arg0: i32, %arg1: memref<128x256xf32, #tpu.memory_space<vmem>>, %arg2: memref<8x128xf32, #tpu.memory_space<vmem>>, %arg3: memref<8x256xf32, #tpu.memory_space<vmem>>) attributes {dimension_semantics = [#tpu.dimension_semantics<parallel>], iteration_bounds = array<i64: 2>, scalar_prefetch = 0 : i64, scratch_operands = 0 : i64, tpu.core_type = #tpu.core_type<tc>, window_params = [{pipeline_mode = #tpu.pipeline_mode<synchronous>, transform_indices = @transform_0, window_bounds = array<i64: 128, 256>}, {transform_indices = @transform_1, window_bounds = array<i64: 8, 128>}, {transform_indices = @transform_2, window_bounds = array<i64: 8, 256>}]} {
    %c0 = arith.constant 0 : index
    %c0_0 = arith.constant 0 : index
    %0 = vector.load %arg2[%c0, %c0_0] : memref<8x128xf32, #tpu.memory_space<vmem>>, vector<8x128xf32>
    %c0_1 = arith.constant 0 : index
    %c0_2 = arith.constant 0 : index
    %1 = vector.load %arg1[%c0_1, %c0_2] : memref<128x256xf32, #tpu.memory_space<vmem>>, vector<128x256xf32>
    %cst = arith.constant dense<0.000000e+00> : vector<8x256xf32>
    %2 = tpu.matmul %0, %1, %cst {dimension_numbers = #tpu.dot_dimension_numbers<[1], [0], [0], [1], [0, 0, 1, 1], [], []>} : vector<8x128xf32>, vector<128x256xf32>, vector<8x256xf32> -> vector<8x256xf32>
    %c0_3 = arith.constant 0 : index
    %c0_4 = arith.constant 0 : index
    %3 = vector.load %arg3[%c0_3, %c0_4] : memref<8x256xf32, #tpu.memory_space<vmem>>, vector<8x256xf32>
    tpu.vector_store %arg3[%c0_3, %c0_4], %2 {strides = array<i32>} : memref<8x256xf32, #tpu.memory_space<vmem>>, vector<8x256xf32>,
    return
  }
  func.func @transform_0(%arg0: i32) -> (i32, i32) {
    %c0_i32 = arith.constant 0 : i32
    %c0_i32_0 = arith.constant 0 : i32
    %c0_i32_1 = arith.constant 0 : i32
    return %c0_i32, %c0_i32_0 : i32, i32
  }
  func.func @transform_1(%arg0: i32) -> (i32, i32) {
    %c0_i32 = arith.constant 0 : i32
    %c0_i32_0 = arith.constant 0 : i32
    return %arg0, %c0_i32 : i32, i32
  }
  func.func @transform_2(%arg0: i32) -> (i32, i32) {
    %c0_i32 = arith.constant 0 : i32
    %c0_i32_0 = arith.constant 0 : i32
    return %arg0, %c0_i32 : i32, i32
  }
}

</mosaic_0001>

<llo_original>
// kernel: tpu_custom_call.1
$region0: #{tpu_custom_call.1}
  #allocation0 [shape = 'u32[]', space=smem, size = 0x4, offset = 0x4, fixed_abs, tag = 'smem constant byte address 0x4 - core index']
  #allocation1 [shape = 'u32[144,128]{1,0:T(1,128)}', space=vmem, size = 0x12000, scoped, tag = 'internal scratch']
  %s0 = inlined_call_operand.hbm [shape: f32[128,256], index: 0, kind: input, shape index: {}]
  %s1 = inlined_call_operand.hbm [shape: f32[16,128], index: 1, kind: input, shape index: {}]
  %s2 = inlined_call_operand.hbm [shape: f32[16,256], index: 2, kind: output, shape index: {}]
  %s3 = sld [smem:[#allocation0]]
  $region49: #{tpu_custom_call.1} parent=0
    _
  %s5 = ssub.s32 1, %s3
  %s6 = scalar_select 0, %s5, %s3
  $region1: #{tpu_custom_call.1} parent=0
    #allocation2 [shape = 'u8[131072]{0}', space=vmem, size = 0x20000, scoped, tag = 'input window, operand 0, single buffered']
    #allocation3 [shape = 's32[2]{0}', space=sflag, size = 0x8, scoped, tag = 'scoped memory for tpu_custom_call.1']
    #allocation4 [shape = 's32[2]{0}', space=sflag, size = 0x8, scoped, tag = 'scoped memory for tpu_custom_call.1']
    #allocation5 [shape = 'u8[8192]{0}', space=vmem, size = 0x2000, scoped, tag = 'input window, operand 1']
    #allocation6 [shape = 's32[2]{0}', space=sflag, size = 0x8, scoped, tag = 'scoped memory for tpu_custom_call.1']
    #allocation7 [shape = 'u8[16384]{0}', space=vmem, size = 0x4000, scoped, tag = 'output window, operand 0']
    %7 = vsyncpa [#allocation3], 0
    %8 = vsyncpa [#allocation6], 0
    %s9 = scalar_lea.sflag [#allocation6], 1
    %10 = vsyncpa %s9, 0
    %11 = vsyncpa [#allocation4], 0
    %s12 = scalar_lea.sflag [#allocation4], 1
    %13 = vsyncpa %s12, 0
    loop: start=0, step=1, limit=4
    $region2: #{tpu_custom_call.1} parent=1 // loop_pre_header
      _
    $region3: #{tpu_custom_call.1} parent=1 // loop_header
      %s15 = sphi 0, %s19
      %p16 = scmp.ge.s32.totalorder %s15, 4
      %s23 = sphi 0, %s23
      %s25 = sphi 0, %s23
      %s26 = sphi 0, %s25
      %s40 = sphi 0, %s26
      %s46 = sphi 0, %s48
      %s49 = sphi 0, %s46
      %s50 = sphi 0, %s49
      %s66 = sphi 0, %s50
      %s72 = sphi 0, %s74
      %s75 = sphi 0, %s72
      %s76 = sphi 0, %s75
      %s92 = sphi 0, %s76
    $region4: #{tpu_custom_call.1} parent=1 // loop_header_branch
      %18 = sbr.rel (%p16) target = $region8
    $region5: #{tpu_custom_call.1} parent=1 // loop_body
      %s20 = ssub.s32 %s15, 1
      %s21 = ssub.s32 %s15, 2
      %s22 = sadd.s32 %s15, 1
      %s24 = sadd.s32 %s23, 1
      %p27 = scmp.eq.s32.totalorder %s15, 1
      %p28 = scmp.ne.s32.totalorder %s23, %s25
      %p29 = scmp.eq.s32.totalorder %s15, 0
      %p30 = por %p28, %p29
      %p31 = scmp.ne.s32.totalorder %s23, %s25
      %p32 = scmp.eq.s32.totalorder %s20, 1
      %p33 = por %p31, %p32
      %p34 = scmp.ne.s32.totalorder %s25, %s26
      %p35 = scmp.eq.s32.totalorder %s20, 0
      %p36 = por %p34, %p35
      %p37 = scmp.ne.s32.totalorder %s25, %s26
      %p38 = scmp.eq.s32.totalorder %s21, 1
      %p39 = por %p37, %p38
      %p41 = scmp.ne.s32.totalorder %s26, %s40
      %p42 = scmp.eq.s32.totalorder %s21, 0
      %p43 = por %p41, %p42
      %s44 = ssub.s32 %s15, %s22
      %p45 = scmp.eq.s32.totalorder %s44, 0
      %s47 = sadd.s32 %s46, 1
      %s48 = scalar_select %p45, %s46, %s47
      %p51 = pneg %p45
      %p52 = scmp.eq.s32.totalorder %s15, 1
      %p53 = por %p51, %p52
      %p54 = scmp.ne.s32.totalorder %s46, %s49
      %p55 = scmp.eq.s32.totalorder %s15, 0
      %p56 = por %p54, %p55
      %p57 = scmp.ne.s32.totalorder %s46, %s49
      %p58 = scmp.eq.s32.totalorder %s20, 1
      %p59 = por %p57, %p58
      %p60 = scmp.ne.s32.totalorder %s49, %s50
      %p61 = scmp.eq.s32.totalorder %s20, 0
      %p62 = por %p60, %p61
      %p63 = scmp.ne.s32.totalorder %s49, %s50
      %p64 = scmp.eq.s32.totalorder %s21, 1
      %p65 = por %p63, %p64
      %p67 = scmp.ne.s32.totalorder %s50, %s66
      %p68 = scmp.eq.s32.totalorder %s21, 0
      %p69 = por %p67, %p68
      %s70 = ssub.s32 %s15, %s22
      %p71 = scmp.eq.s32.totalorder %s70, 0
      %s73 = sadd.s32 %s72, 1
      %s74 = scalar_select %p71, %s72, %s73
      %p77 = pneg %p71
      %p78 = scmp.eq.s32.totalorder %s15, 1
      %p79 = por %p77, %p78
      %p80 = scmp.ne.s32.totalorder %s72, %s75
      %p81 = scmp.eq.s32.totalorder %s15, 0
      %p82 = por %p80, %p81
      %p83 = scmp.ne.s32.totalorder %s72, %s75
      %p84 = scmp.eq.s32.totalorder %s20, 1
      %p85 = por %p83, %p84
      %p86 = scmp.ne.s32.totalorder %s75, %s76
      %p87 = scmp.eq.s32.totalorder %s20, 0
      %p88 = por %p86, %p87
      %p89 = scmp.ne.s32.totalorder %s75, %s76
      %p90 = scmp.eq.s32.totalorder %s21, 1
      %p91 = por %p89, %p90
      %p93 = scmp.ne.s32.totalorder %s76, %s92
      %p94 = scmp.eq.s32.totalorder %s21, 0
      %p95 = por %p93, %p94
      %p96 = scmp.le.s32.totalorder 1, %s15
      %p97 = scmp.lt.s32.totalorder %s15, 3
      %p98 = pnand %p96, %p97
      %p99 = pneg %p98
      // Predicated region
      $region9: #{tpu_custom_call.1} parent=5 // pred_check
        _
      $region10: #{tpu_custom_call.1} parent=5 // pred_check_branch
        %101 = sbr.rel (%p98) target = $region12
      $region11: #{tpu_custom_call.1} parent=5 // pred_region
        %s102 = ssub.s32 %s15, 1
        // Predicated region
        $region13: #{tpu_custom_call.1} parent=11 // pred_check
          %p103 = pneg %p36
        $region14: #{tpu_custom_call.1} parent=11 // pred_check_branch
          %105 = sbr.rel (%p103) target = $region16
        $region15: #{tpu_custom_call.1} parent=11 // pred_region
          %s107 = ssub.s32 4096, 4096
          %108 = vsyncadd [#allocation3], %s107
          %s109 = sshll.u32 [#allocation2], 4
          %s110 = int_to_ptr.vmem [resolvable:$true] %s109
          %115 = dma.hbm_to_vmem [thread:$0]  %s0, 4096, %s110, [#allocation3], 256, 256, 16
        $region16: #{tpu_custom_call.1} parent=11 // pred_fallthru
          _
      $region12: #{tpu_custom_call.1} parent=5 // pred_fallthru
        _
      %p116 = scmp.lt.s32.totalorder %s15, 2
      // Predicated region
      $region17: #{tpu_custom_call.1} parent=5 // pred_check
        %p117 = pneg %p116
      $region18: #{tpu_custom_call.1} parent=5 // pred_check_branch
        %119 = sbr.rel (%p117) target = $region20
      $region19: #{tpu_custom_call.1} parent=5 // pred_region
        // Predicated region
        $region21: #{tpu_custom_call.1} parent=19 // pred_check
          %p120 = pneg %p56
        $region22: #{tpu_custom_call.1} parent=19 // pred_check_branch
          %122 = sbr.rel (%p120) target = $region24
        $region23: #{tpu_custom_call.1} parent=19 // pred_region
          %s123 = sand.u32 %s46, 1
          %s124 = scalar_lea.sflag [#allocation6], %s123
          %s125 = sand.u32 %s46, 1
          %s126 = smul.addr %s125, 8
          %s127 = scalar_lea.vmem [#allocation5], %s126
          %s129 = ssub.s32 128, 128
          %130 = vsyncadd %s124, %s129
          %s131 = smul.addr %s15, 128
          %s132 = scalar_lea.hbm %s1, %s131
          %s134 = sshll.u32 %s127, 4
          %s135 = int_to_ptr.vmem [resolvable:$true] %s134
          %137 = dma.hbm_to_vmem [thread:$0]  %s132, 128, %s135, %s124
        $region24: #{tpu_custom_call.1} parent=19 // pred_fallthru
          _
      $region20: #{tpu_custom_call.1} parent=5 // pred_fallthru
        _
      %p138 = scmp.le.s32.totalorder 1, %s15
      %p139 = scmp.lt.s32.totalorder %s15, 3
      %p140 = pnand %p138, %p139
      %p141 = pneg %p140
      // Predicated region
      $region25: #{tpu_custom_call.1} parent=5 // pred_check
        _
      $region26: #{tpu_custom_call.1} parent=5 // pred_check_branch
        %143 = sbr.rel (%p140) target = $region28
      $region27: #{tpu_custom_call.1} parent=5 // pred_region
        %s144 = ssub.s32 %s15, 1
        // Predicated region
        $region29: #{tpu_custom_call.1} parent=27 // pred_check
          %p145 = pneg %p36
        $region30: #{tpu_custom_call.1} parent=27 // pred_check_branch
          %147 = sbr.rel (%p145) target = $region32
        $region31: #{tpu_custom_call.1} parent=27 // pred_region
          %148 = dma.done [#allocation3], 4096
        $region32: #{tpu_custom_call.1} parent=27 // pred_fallthru
          _
        %s149 = sand.u32 %s49, 1
        %s150 = scalar_lea.sflag [#allocation6], %s149
        %s151 = sand.u32 %s49, 1
        %s152 = smul.addr %s151, 8
        %s153 = scalar_lea.vmem [#allocation5], %s152
        // Predicated region
        $region33: #{tpu_custom_call.1} parent=27 // pred_check
          %p154 = pneg %p62
        $region34: #{tpu_custom_call.1} parent=27 // pred_check_branch
          %156 = sbr.rel (%p154) target = $region36
        $region35: #{tpu_custom_call.1} parent=27 // pred_region
          %157 = dma.done %s150, 128
        $region36: #{tpu_custom_call.1} parent=27 // pred_fallthru
          _
        %p158 = pneg %p36
        %p159 = pneg %p33
        %s160 = sand.u32 %s49, 1
        %s161 = scalar_lea.sflag [#allocation6], %s160
        %s162 = sand.u32 %s49, 1
        %s163 = smul.addr %s162, 8
        %s164 = scalar_lea.vmem [#allocation5], %s163
        %p165 = pneg %p62
        %p166 = pneg %p59
        %p167 = pneg %p88
        %p168 = pneg %p85
        %s169 = sand.u32 %s75, 1
        %s170 = scalar_lea.sflag [#allocation4], %s169
        %s171 = sand.u32 %s75, 1
        %s172 = smul.addr %s171, 16
        %s173 = scalar_lea.vmem [#allocation7], %s172
        %v174 = vld [vmem:[%s153] sm:$0xff]
        %v175 = vld [vmem:[#allocation2] sm:$0xff]
        %v176 = vld [vmem:[#allocation2 + $0x8] sm:$0xff]
        %v177 = vld [vmem:[#allocation2 + $0x10] sm:$0xff]
        %v178 = vld [vmem:[#allocation2 + $0x18] sm:$0xff]
        %v179 = vld [vmem:[#allocation2 + $0x20] sm:$0xff]
        %v180 = vld [vmem:[#allocation2 + $0x28] sm:$0xff]
        %v181 = vld [vmem:[#allocation2 + $0x30] sm:$0xff]
        %v182 = vld [vmem:[#allocation2 + $0x38] sm:$0xff]
        %v183 = vld [vmem:[#allocation2 + $0x40] sm:$0xff]
        %v184 = vld [vmem:[#allocation2 + $0x48] sm:$0xff]
        %v185 = vld [vmem:[#allocation2 + $0x50] sm:$0xff]
        %v186 = vld [vmem:[#allocation2 + $0x58] sm:$0xff]
        %v187 = vld [vmem:[#allocation2 + $0x60] sm:$0xff]
        %v188 = vld [vmem:[#allocation2 + $0x68] sm:$0xff]
        %v189 = vld [vmem:[#allocation2 + $0x70] sm:$0xff]
        %v190 = vld [vmem:[#allocation2 + $0x78] sm:$0xff]
        %v191 = vld [vmem:[#allocation2 + $0x80] sm:$0xff]
        %v192 = vld [vmem:[#allocation2 + $0x88] sm:$0xff]
        %v193 = vld [vmem:[#allocation2 + $0x90] sm:$0xff]
        %v194 = vld [vmem:[#allocation2 + $0x98] sm:$0xff]
        %v195 = vld [vmem:[#allocation2 + $0xa0] sm:$0xff]
        %v196 = vld [vmem:[#allocation2 + $0xa8] sm:$0xff]
        %v197 = vld [vmem:[#allocation2 + $0xb0] sm:$0xff]
        %v198 = vld [vmem:[#allocation2 + $0xb8] sm:$0xff]
        %v199 = vld [vmem:[#allocation2 + $0xc0] sm:$0xff]
        %v200 = vld [vmem:[#allocation2 + $0xc8] sm:$0xff]
        %v201 = vld [vmem:[#allocation2 + $0xd0] sm:$0xff]
        %v202 = vld [vmem:[#allocation2 + $0xd8] sm:$0xff]
        %v203 = vld [vmem:[#allocation2 + $0xe0] sm:$0xff]
        %v204 = vld [vmem:[#allocation2 + $0xe8] sm:$0xff]
        %v205 = vld [vmem:[#allocation2 + $0xf0] sm:$0xff]
        %v206 = vld [vmem:[#allocation2 + $0xf8] sm:$0xff]
        %207 = vmatprep.subr.mxu0 %v176
        %208 = vmatpush1.msra.mxu0 %v175
        %209 = vmatprep.subr.mxu0 %v178
        %210 = vmatpush1.msra.mxu0 %v177
        %211 = vmatprep.subr.mxu0 %v180
        %212 = vmatpush1.msra.mxu0 %v179
        %213 = vmatprep.subr.mxu0 %v182
        %214 = vmatpush1.msra.mxu0 %v181
        %215 = vmatprep.subr.mxu0 %v184
        %216 = vmatpush1.msra.mxu0 %v183
        %217 = vmatprep.subr.mxu0 %v186
        %218 = vmatpush1.msra.mxu0 %v185
        %219 = vmatprep.subr.mxu0 %v188
        %220 = vmatpush1.msra.mxu0 %v187
        %221 = vmatprep.subr.mxu0 %v190
        %222 = vmatpush1.msra.mxu0 %v189
        %223 = vmatprep.subr.mxu0 %v192
        %224 = vmatpush1.msra.mxu0 %v191
        %225 = vmatprep.subr.mxu0 %v194
        %226 = vmatpush1.msra.mxu0 %v193
        %227 = vmatprep.subr.mxu0 %v196
        %228 = vmatpush1.msra.mxu0 %v195
        %229 = vmatprep.subr.mxu0 %v198
        %230 = vmatpush1.msra.mxu0 %v197
        %231 = vmatprep.subr.mxu0 %v200
        %232 = vmatpush1.msra.mxu0 %v199
        %233 = vmatprep.subr.mxu0 %v202
        %234 = vmatpush1.msra.mxu0 %v201
        %235 = vmatprep.subr.mxu0 %v204
        %236 = vmatpush1.msra.mxu0 %v203
        %237 = vmatprep.subr.mxu0 %v206
        %238 = vmatpush1.msra.mxu0 %v205
        %239 = vmatprep.subr.mxu0 0.0
        %240 = vmatpush1.msra.mxu0 0.0
        %241 = vmatprep.subr.mxu0 0.0
        %242 = vmatpush1.msra.mxu0 0.0
        %243 = vmatprep.subr.mxu0 0.0
        %244 = vmatpush1.msra.mxu0 0.0
        %245 = vmatprep.subr.mxu0 0.0
        %246 = vmatpush1.msra.mxu0 0.0
        %247 = vmatprep.subr.mxu0 0.0
        %248 = vmatpush1.msra.mxu0 0.0
        %249 = vmatprep.subr.mxu0 0.0
        %250 = vmatpush1.msra.mxu0 0.0
        %251 = vmatprep.subr.mxu0 0.0
        %252 = vmatpush1.msra.mxu0 0.0
        %253 = vmatprep.subr.mxu0 0.0
        %254 = vmatpush1.msra.mxu0 0.0
        %255 = vmatprep.subr.mxu0 0.0
        %256 = vmatpush1.msra.mxu0 0.0
        %257 = vmatprep.subr.mxu0 0.0
        %258 = vmatpush1.msra.mxu0 0.0
        %259 = vmatprep.subr.mxu0 0.0
        %260 = vmatpush1.msra.mxu0 0.0
        %261 = vmatprep.subr.mxu0 0.0
        %262 = vmatpush1.msra.mxu0 0.0
        %263 = vmatprep.subr.mxu0 0.0
        %264 = vmatpush1.msra.mxu0 0.0
        %265 = vmatprep.subr.mxu0 0.0
        %266 = vmatpush1.msra.mxu0 0.0
        %267 = vmatprep.subr.mxu0 0.0
        %268 = vmatpush1.msra.mxu0 0.0
        %269 = vmatprep.subr.mxu0 0.0
        %270 = vmatpush1.msra.mxu0 0.0
        %271 = vmatprep.mubr.f32.mxu0 0.0
        %272 = vmatmul.mubr.f32.gmra.mrb[0].mxu0 %v174
        %v273 = vpop.f32.mrb[0].mxu0
        %v274 = vadd.f32 0.0, %v273
        %v275 = vpop.f32.mrb[0].mxu0
        %v276 = vadd.f32 0.0, %v275
        %277 = vdwg.mxu0
        %278 = vst [vmem:[%s173] sm:$0xff] %v274
        %279 = vst [vmem:[%s173 + $0x8] sm:$0xff] %v276
        %s280 = sand.u32 %s75, 1
        %s281 = scalar_lea.sflag [#allocation4], %s280
        %s282 = sand.u32 %s75, 1
        %s283 = smul.addr %s282, 16
        %s284 = scalar_lea.vmem [#allocation7], %s283
        // Predicated region
        $region37: #{tpu_custom_call.1} parent=27 // pred_check
          %p285 = pneg %p85
        $region38: #{tpu_custom_call.1} parent=27 // pred_check_branch
          %287 = sbr.rel (%p285) target = $region40
        $region39: #{tpu_custom_call.1} parent=27 // pred_region
          %s289 = ssub.s32 256, 256
          %290 = vsyncadd %s281, %s289
          %s291 = smul.addr %s20, 2
          %s292 = smul.addr %s291, 128
          %s293 = scalar_lea.hbm %s2, %s292
          %s295 = sshll.u32 %s284, 4
          %s296 = int_to_ptr.vmem [resolvable:$true] %s295
          %298 = dma.vmem_to_hbm [thread:$0]  %s296, 256, %s293, %s281
        $region40: #{tpu_custom_call.1} parent=27 // pred_fallthru
          _
      $region28: #{tpu_custom_call.1} parent=5 // pred_fallthru
        _
      %p299 = scmp.le.s32.totalorder 2, %s15
      // Predicated region
      $region41: #{tpu_custom_call.1} parent=5 // pred_check
        %p300 = pneg %p299
      $region42: #{tpu_custom_call.1} parent=5 // pred_check_branch
        %302 = sbr.rel (%p300) target = $region44
      $region43: #{tpu_custom_call.1} parent=5 // pred_region
        %s303 = ssub.s32 %s15, 2
        // Predicated region
        $region45: #{tpu_custom_call.1} parent=43 // pred_check
          %p304 = pneg %p91
        $region46: #{tpu_custom_call.1} parent=43 // pred_check_branch
          %306 = sbr.rel (%p304) target = $region48
        $region47: #{tpu_custom_call.1} parent=43 // pred_region
          %s307 = sand.u32 %s76, 1
          %s308 = scalar_lea.sflag [#allocation4], %s307
          %s309 = sand.u32 %s76, 1
          %s310 = smul.addr %s309, 16
          %s311 = scalar_lea.vmem [#allocation7], %s310
          %312 = dma.done %s308, 256
        $region48: #{tpu_custom_call.1} parent=43 // pred_fallthru
          _
      $region44: #{tpu_custom_call.1} parent=5 // pred_fallthru
        _
    $region6: #{tpu_custom_call.1} parent=1 // loop_footer
      %s19 = sadd.s32 1, %s15
    $region7: #{tpu_custom_call.1} parent=1 // loop_footer_branch
      %14 = sbr.rel target = $region3
    $region8: #{tpu_custom_call.1} parent=1 // loop_exit
      _
    %313 = vsyncpa [#allocation3], 1
    %s314 = scalar_lea.sflag [#allocation3], 1
    %315 = vsyncpa %s314, 1
    %316 = vsyncpa [#allocation6], 1
    %s317 = scalar_lea.sflag [#allocation6], 1
    %318 = vsyncpa %s317, 1
    %319 = vsyncpa [#allocation4], 1
    %s320 = scalar_lea.sflag [#allocation4], 1
    %321 = vsyncpa %s320, 1

</llo_original>
